<compile_context>
chip_gen: v5e
topology: v5e:2x2
jax: 0.10.0
libtpu: 0.0.40
codegen_flags: <defaults>
</compile_context>

<pallas_src>
import jax
import jax.numpy as jnp
from jax.experimental import pallas as pl
from jax.experimental.pallas import tpu as pltpu


def mlp_kernel(x_ref, w1_ref, b1_ref, w2_ref, b2_ref, w3_ref, b3_ref, o_ref):
    # fc1 + ReLU (bf16 MXU matmul, f32 accumulation)
    h1 = jnp.dot(x_ref[...], w1_ref[...], preferred_element_type=jnp.float32)
    h1 = jnp.maximum(h1 + b1_ref[...], 0.0)                     # (tB, 128) f32

    # fc2 + Sigmoid (sigmoid kept in f32 on the EUP)
    h2 = jnp.dot(h1.astype(w2_ref.dtype), w2_ref[...],
                 preferred_element_type=jnp.float32)
    h2 = jax.nn.sigmoid(h2 + b2_ref[...])                       # (tB, 128) f32

    # fc3 (no activation)
    h3 = jnp.dot(h2.astype(w3_ref.dtype), w3_ref[...],
                 preferred_element_type=jnp.float32)
    o_ref[...] = (h3 + b3_ref[...]).astype(o_ref.dtype)         # (tB, 128) f32


def _round_up(x, m):
    return (x + m - 1) // m * m


def mlp_forward(x, w1, b1, w2, b2, w3, b3, *, tile_b=None,
                compute_dtype=jnp.bfloat16):
    """x:(B,784), w*: (in,out), b*: (1,out).  Returns (B, 10) float32."""
    B, K = x.shape
    H1 = w1.shape[1]
    H2 = w2.shape[1]
    OUT = w3.shape[1]

    # Lane-dense (multiple-of-128) feature dims.
    Kp = _round_up(K, 128)      # 896
    H1p = _round_up(H1, 128)    # 128
    H2p = _round_up(H2, 128)    # 128
    OUTp = _round_up(OUT, 128)  # 128

    # Batch tile: multiple of 16 (bf16 sublane pack), capped for VMEM headroom.
    if tile_b is None:
        tile_b = min(512, _round_up(B, 16))
    Bp = _round_up(B, tile_b)

    # Zero-padded, dtype-converted operands (weights bf16, biases f32).
    xp = jnp.zeros((Bp, Kp), compute_dtype).at[:B, :K].set(x.astype(compute_dtype))
    w1p = jnp.zeros((Kp, H1p), compute_dtype).at[:K, :H1].set(w1.astype(compute_dtype))
    b1p = jnp.zeros((1, H1p), jnp.float32).at[:, :H1].set(b1)
    w2p = jnp.zeros((H1p, H2p), compute_dtype).at[:H1, :H2].set(w2.astype(compute_dtype))
    b2p = jnp.zeros((1, H2p), jnp.float32).at[:, :H2].set(b2)
    w3p = jnp.zeros((H2p, OUTp), compute_dtype).at[:H2, :OUT].set(w3.astype(compute_dtype))
    b3p = jnp.zeros((1, OUTp), jnp.float32).at[:, :OUT].set(b3)

    def nbytes(a):
        return a.size * a.dtype.itemsize

    cost = pl.CostEstimate(
        flops=2 * Bp * (Kp * H1p + H1p * H2p + H2p * OUTp),
        transcendentals=Bp * H2p,
        bytes_accessed=sum(nbytes(a) for a in
                           (xp, w1p, b1p, w2p, b2p, w3p, b3p)) + Bp * OUTp * 4,
    )

    const = lambda shape: pl.BlockSpec(shape, lambda i: (0, 0))

    out = pl.pallas_call(
        mlp_kernel,
        out_shape=jax.ShapeDtypeStruct((Bp, OUTp), jnp.float32),
        grid=(Bp // tile_b,),
        in_specs=[
            pl.BlockSpec((tile_b, Kp), lambda i: (i, 0)),   # x: tiled over batch
            const((Kp, H1p)), const((1, H1p)),              # fc1 (VMEM-resident)
            const((H1p, H2p)), const((1, H2p)),             # fc2
            const((H2p, OUTp)), const((1, OUTp)),           # fc3
        ],
        out_specs=pl.BlockSpec((tile_b, OUTp), lambda i: (i, 0)),
        compiler_params=pltpu.CompilerParams(
            dimension_semantics=("parallel",)),
        cost_estimate=cost,
    )(xp, w1p, b1p, w2p, b2p, w3p, b3p)

    return out[:B, :OUT]


def init_linear(key, in_features, out_features):
    """Deterministic init mimicking nn.Linear default: U(-1/sqrt(fan_in), ...)."""
    kw, kb = jax.random.split(key)
    bound = 1.0 / jnp.sqrt(in_features)
    # Stored as (in, out) so the kernel computes x @ W directly.
    w = jax.random.uniform(kw, (in_features, out_features), jnp.float32,
                           minval=-bound, maxval=bound)
    b = jax.random.uniform(kb, (1, out_features), jnp.float32,
                           minval=-bound, maxval=bound)
    return w, b


def reference_f32(x, w1, b1, w2, b2, w3, b3):
    h1 = jnp.maximum(x @ w1 + b1, 0.0)
    h2 = jax.nn.sigmoid(h1 @ w2 + b2)
    return h2 @ w3 + b3


def reference_bf16(x, w1, b1, w2, b2, w3, b3):
    """Same precision path as the kernel (bf16 matmul inputs, f32 accum)."""
    bf = jnp.bfloat16
    h1 = jnp.dot(x.astype(bf), w1.astype(bf),
                 preferred_element_type=jnp.float32) + b1
    h1 = jnp.maximum(h1, 0.0)
    h2 = jnp.dot(h1.astype(bf), w2.astype(bf),
                 preferred_element_type=jnp.float32) + b2
    h2 = jax.nn.sigmoid(h2)
    return jnp.dot(h2.astype(bf), w3.astype(bf),
                   preferred_element_type=jnp.float32) + b3


if __name__ == "__main__":
    key = jax.random.PRNGKey(0)
    kx, k1, k2, k3 = jax.random.split(key, 4)

    B = 8
    x = jax.random.normal(kx, (B, 784), jnp.float32)
    w1, b1 = init_linear(k1, 784, 128)
    w2, b2 = init_linear(k2, 128, 64)
    w3, b3 = init_linear(k3, 64, 10)

    out = mlp_forward(x, w1, b1, w2, b2, w3, b3)
    out = jax.block_until_ready(out)
    assert out.shape == (B, 10)

    # Tight check against a reference using the same bf16 matmul precision.
    ref_bf = reference_bf16(x, w1, b1, w2, b2, w3, b3)
    assert jnp.allclose(out, ref_bf, atol=2e-3, rtol=2e-3), \
        "mismatch vs bf16-precision reference"

    # Looser sanity check against the pure-f32 PyTorch-equivalent forward.
    ref_f32 = reference_f32(x, w1, b1, w2, b2, w3, b3)
    assert jnp.allclose(out, ref_f32, atol=3e-2, rtol=3e-2), \
        "mismatch vs f32 reference"

    print("KERNEL_OK")
</pallas_src>

<mosaic_0001>
module attributes {stable_mosaic.version = 11 : i64} {
  func.func @mlp_kernel(%arg0: i32, %arg1: memref<16x896xbf16, #tpu.memory_space<vmem>>, %arg2: memref<896x128xbf16, #tpu.memory_space<vmem>>, %arg3: memref<1x128xf32, #tpu.memory_space<vmem>>, %arg4: memref<128x128xbf16, #tpu.memory_space<vmem>>, %arg5: memref<1x128xf32, #tpu.memory_space<vmem>>, %arg6: memref<128x128xbf16, #tpu.memory_space<vmem>>, %arg7: memref<1x128xf32, #tpu.memory_space<vmem>>, %arg8: memref<16x128xf32, #tpu.memory_space<vmem>>) attributes {dimension_semantics = [#tpu.dimension_semantics<parallel>], iteration_bounds = array<i64: 1>, scalar_prefetch = 0 : i64, scratch_operands = 0 : i64, tpu.core_type = #tpu.core_type<tc>, window_params = [{transform_indices = @transform_0, window_bounds = array<i64: 16, 896>}, {pipeline_mode = #tpu.pipeline_mode<synchronous>, transform_indices = @transform_1, window_bounds = array<i64: 896, 128>}, {pipeline_mode = #tpu.pipeline_mode<synchronous>, transform_indices = @transform_2, window_bounds = array<i64: 1, 128>}, {pipeline_mode = #tpu.pipeline_mode<synchronous>, transform_indices = @transform_3, window_bounds = array<i64: 128, 128>}, {pipeline_mode = #tpu.pipeline_mode<synchronous>, transform_indices = @transform_4, window_bounds = array<i64: 1, 128>}, {pipeline_mode = #tpu.pipeline_mode<synchronous>, transform_indices = @transform_5, window_bounds = array<i64: 128, 128>}, {pipeline_mode = #tpu.pipeline_mode<synchronous>, transform_indices = @transform_6, window_bounds = array<i64: 1, 128>}, {transform_indices = @transform_7, window_bounds = array<i64: 16, 128>}]} {
    %c0 = arith.constant 0 : index
    %c0_0 = arith.constant 0 : index
    %0 = vector.load %arg1[%c0, %c0_0] : memref<16x896xbf16, #tpu.memory_space<vmem>>, vector<16x896xbf16>
    %c0_1 = arith.constant 0 : index
    %c0_2 = arith.constant 0 : index
    %1 = vector.load %arg2[%c0_1, %c0_2] : memref<896x128xbf16, #tpu.memory_space<vmem>>, vector<896x128xbf16>
    %cst = arith.constant dense<0.000000e+00> : vector<16x128xf32>
    %2 = tpu.matmul %0, %1, %cst {dimension_numbers = #tpu.dot_dimension_numbers<[1], [0], [0], [1], [0, 0, 1, 1], [], []>} : vector<16x896xbf16>, vector<896x128xbf16>, vector<16x128xf32> -> vector<16x128xf32>
    %c0_3 = arith.constant 0 : index
    %c0_4 = arith.constant 0 : index
    %3 = vector.load %arg3[%c0_3, %c0_4] : memref<1x128xf32, #tpu.memory_space<vmem>>, vector<1x128xf32>
    %4 = vector.broadcast %3 : vector<1x128xf32> to vector<16x128xf32>
    %5 = arith.addf %2, %4 : vector<16x128xf32>
    %cst_5 = arith.constant 0.000000e+00 : f32
    %6 = vector.broadcast %cst_5 : f32 to vector<16x128xf32>
    %7 = arith.maximumf %5, %6 : vector<16x128xf32>
    %8 = arith.truncf %7 : vector<16x128xf32> to vector<16x128xbf16>
    %c0_6 = arith.constant 0 : index
    %c0_7 = arith.constant 0 : index
    %9 = vector.load %arg4[%c0_6, %c0_7] : memref<128x128xbf16, #tpu.memory_space<vmem>>, vector<128x128xbf16>
    %cst_8 = arith.constant dense<0.000000e+00> : vector<16x128xf32>
    %10 = tpu.matmul %8, %9, %cst_8 {dimension_numbers = #tpu.dot_dimension_numbers<[1], [0], [0], [1], [0, 0, 1, 1], [], []>} : vector<16x128xbf16>, vector<128x128xbf16>, vector<16x128xf32> -> vector<16x128xf32>
    %c0_9 = arith.constant 0 : index
    %c0_10 = arith.constant 0 : index
    %11 = vector.load %arg5[%c0_9, %c0_10] : memref<1x128xf32, #tpu.memory_space<vmem>>, vector<1x128xf32>
    %12 = vector.broadcast %11 : vector<1x128xf32> to vector<16x128xf32>
    %13 = arith.addf %10, %12 : vector<16x128xf32>
    %14 = arith.negf %13 : vector<16x128xf32>
    %15 = math.exp %14 : vector<16x128xf32>
    %cst_11 = arith.constant 1.000000e+00 : f32
    %16 = vector.broadcast %cst_11 : f32 to vector<16x128xf32>
    %17 = arith.addf %16, %15 : vector<16x128xf32>
    %18 = arith.divf %16, %17 : vector<16x128xf32>
    %19 = arith.truncf %18 : vector<16x128xf32> to vector<16x128xbf16>
    %c0_12 = arith.constant 0 : index
    %c0_13 = arith.constant 0 : index
    %20 = vector.load %arg6[%c0_12, %c0_13] : memref<128x128xbf16, #tpu.memory_space<vmem>>, vector<128x128xbf16>
    %cst_14 = arith.constant dense<0.000000e+00> : vector<16x128xf32>
    %21 = tpu.matmul %19, %20, %cst_14 {dimension_numbers = #tpu.dot_dimension_numbers<[1], [0], [0], [1], [0, 0, 1, 1], [], []>} : vector<16x128xbf16>, vector<128x128xbf16>, vector<16x128xf32> -> vector<16x128xf32>
    %c0_15 = arith.constant 0 : index
    %c0_16 = arith.constant 0 : index
    %22 = vector.load %arg7[%c0_15, %c0_16] : memref<1x128xf32, #tpu.memory_space<vmem>>, vector<1x128xf32>
    %23 = vector.broadcast %22 : vector<1x128xf32> to vector<16x128xf32>
    %24 = arith.addf %21, %23 : vector<16x128xf32>
    %c0_17 = arith.constant 0 : index
    %c0_18 = arith.constant 0 : index
    %25 = vector.load %arg8[%c0_17, %c0_18] : memref<16x128xf32, #tpu.memory_space<vmem>>, vector<16x128xf32>
    tpu.vector_store %arg8[%c0_17, %c0_18], %24 {strides = array<i32>} : memref<16x128xf32, #tpu.memory_space<vmem>>, vector<16x128xf32>,
    return
  }
  func.func @transform_0(%arg0: i32) -> (i32, i32) {
    %c0_i32 = arith.constant 0 : i32
    %c0_i32_0 = arith.constant 0 : i32
    return %arg0, %c0_i32 : i32, i32
  }
  func.func @transform_1(%arg0: i32) -> (i32, i32) {
    %c0_i32 = arith.constant 0 : i32
    %c0_i32_0 = arith.constant 0 : i32
    %c0_i32_1 = arith.constant 0 : i32
    return %c0_i32, %c0_i32_0 : i32, i32
  }
  func.func @transform_2(%arg0: i32) -> (i32, i32) {
    %c0_i32 = arith.constant 0 : i32
    %c0_i32_0 = arith.constant 0 : i32
    %c0_i32_1 = arith.constant 0 : i32
    return %c0_i32, %c0_i32_0 : i32, i32
  }
  func.func @transform_3(%arg0: i32) -> (i32, i32) {
    %c0_i32 = arith.constant 0 : i32
    %c0_i32_0 = arith.constant 0 : i32
    %c0_i32_1 = arith.constant 0 : i32
    return %c0_i32, %c0_i32_0 : i32, i32
  }
  func.func @transform_4(%arg0: i32) -> (i32, i32) {
    %c0_i32 = arith.constant 0 : i32
    %c0_i32_0 = arith.constant 0 : i32
    %c0_i32_1 = arith.constant 0 : i32
    return %c0_i32, %c0_i32_0 : i32, i32
  }
  func.func @transform_5(%arg0: i32) -> (i32, i32) {
    %c0_i32 = arith.constant 0 : i32
    %c0_i32_0 = arith.constant 0 : i32
    %c0_i32_1 = arith.constant 0 : i32
    return %c0_i32, %c0_i32_0 : i32, i32
  }
  func.func @transform_6(%arg0: i32) -> (i32, i32) {
    %c0_i32 = arith.constant 0 : i32
    %c0_i32_0 = arith.constant 0 : i32
    %c0_i32_1 = arith.constant 0 : i32
    return %c0_i32, %c0_i32_0 : i32, i32
  }
  func.func @transform_7(%arg0: i32) -> (i32, i32) {
    %c0_i32 = arith.constant 0 : i32
    %c0_i32_0 = arith.constant 0 : i32
    return %arg0, %c0_i32 : i32, i32
  }
}

</mosaic_0001>

<llo_original>
// kernel: tpu_custom_call.1
$region0: #{tpu_custom_call.1}
  #allocation0 [shape = 'u32[]', space=smem, size = 0x4, offset = 0x4, fixed_abs, tag = 'smem constant byte address 0x4 - core index']
  #allocation1 [shape = 'u32[72,128]{1,0:T(1,128)}', space=vmem, size = 0x9000, scoped, tag = 'internal scratch']
  %s0 = inlined_call_operand.hbm [shape: bf16[16,896], index: 0, kind: input, shape index: {}]
  %s1 = inlined_call_operand.hbm [shape: bf16[896,128], index: 1, kind: input, shape index: {}]
  %s2 = inlined_call_operand.vmem [shape: f32[1,128], index: 2, kind: input, shape index: {}]
  %s3 = inlined_call_operand.hbm [shape: bf16[128,128], index: 3, kind: input, shape index: {}]
  %s4 = inlined_call_operand.vmem [shape: f32[1,128], index: 4, kind: input, shape index: {}]
  %s5 = inlined_call_operand.hbm [shape: bf16[128,128], index: 5, kind: input, shape index: {}]
  %s6 = inlined_call_operand.vmem [shape: f32[1,128], index: 6, kind: input, shape index: {}]
  %s7 = inlined_call_operand.hbm [shape: f32[16,128], index: 7, kind: output, shape index: {}]
  %s8 = sld [smem:[#allocation0]]
  $region54: #{tpu_custom_call.1} parent=0
    _
  %s10 = ssub.s32 1, %s8
  %s11 = scalar_select 0, %s10, %s8
  $region1: #{tpu_custom_call.1} parent=0
    #allocation2 [shape = 'u8[28672]{0}', space=vmem, size = 0x7000, scoped, tag = 'input window, operand 0, single buffered']
    #allocation3 [shape = 's32[1]{0}', space=sflag, size = 0x4, scoped, tag = 'scoped memory for tpu_custom_call.1']
    #allocation4 [shape = 's32[1]{0}', space=sflag, size = 0x4, scoped, tag = 'scoped memory for tpu_custom_call.1']
    #allocation5 [shape = 'u8[229376]{0}', space=vmem, size = 0x38000, scoped, tag = 'input window, operand 1, single buffered']
    #allocation6 [shape = 's32[1]{0}', space=sflag, size = 0x4, scoped, tag = 'scoped memory for tpu_custom_call.1']
    #allocation7 [shape = 'u8[32768]{0}', space=vmem, size = 0x8000, scoped, tag = 'input window, operand 3, single buffered']
    #allocation8 [shape = 'u8[32768]{0}', space=vmem, size = 0x8000, scoped, tag = 'input window, operand 5, single buffered']
    #allocation9 [shape = 's32[1]{0}', space=sflag, size = 0x4, scoped, tag = 'scoped memory for tpu_custom_call.1']
    #allocation10 [shape = 'u8[8192]{0}', space=vmem, size = 0x2000, scoped, tag = 'output window, operand 0, single buffered']
    %12 = vsyncpa [#allocation3], 0
    %13 = vsyncpa [#allocation6], 0
    %14 = vsyncpa [#allocation9], 0
    %15 = vsyncpa [#allocation4], 0
    // Predicated region
    $region2: #{tpu_custom_call.1} parent=1 // pred_check
      _
    $region3: #{tpu_custom_call.1} parent=1 // pred_check_branch
      %17 = sbr.rel (0) target = $region5
    $region4: #{tpu_custom_call.1} parent=1 // pred_region
      %19 = vsyncadd [#allocation3], 0
      %s20 = sshll.u32 %s0, 4
      %s21 = int_to_ptr.hbm [resolvable:$true] %s20
      %s22 = sshll.u32 [#allocation2], 4
      %s23 = int_to_ptr.vmem [resolvable:$true] %s22
      %28 = dma.hbm_to_vmem [thread:$0]  %s21, 896, %s23, [#allocation3], 448, 448, 28
    $region5: #{tpu_custom_call.1} parent=1 // pred_fallthru
      _
    // Predicated region
    $region6: #{tpu_custom_call.1} parent=1 // pred_check
      _
    $region7: #{tpu_custom_call.1} parent=1 // pred_check_branch
      %30 = sbr.rel (0) target = $region9
    $region8: #{tpu_custom_call.1} parent=1 // pred_region
      %32 = vsyncadd [#allocation6], 0
      %s33 = sshll.u32 %s1, 4
      %s34 = int_to_ptr.hbm [resolvable:$true] %s33
      %s35 = sshll.u32 [#allocation5], 4
      %s36 = int_to_ptr.vmem [resolvable:$true] %s35
      %41 = dma.hbm_to_vmem [thread:$0]  %s34, 7168, %s36, [#allocation6], 64, 64, 4
    $region9: #{tpu_custom_call.1} parent=1 // pred_fallthru
      _
    // Predicated region
    $region10: #{tpu_custom_call.1} parent=1 // pred_check
      _
    $region11: #{tpu_custom_call.1} parent=1 // pred_check_branch
      %43 = sbr.rel (0) target = $region13
    $region12: #{tpu_custom_call.1} parent=1 // pred_region
      _
    $region13: #{tpu_custom_call.1} parent=1 // pred_fallthru
      _
    // Predicated region
    $region14: #{tpu_custom_call.1} parent=1 // pred_check
      _
    $region15: #{tpu_custom_call.1} parent=1 // pred_check_branch
      %45 = sbr.rel (0) target = $region17
    $region16: #{tpu_custom_call.1} parent=1 // pred_region
      %47 = vsyncadd [#allocation6], 0
      %s48 = sshll.u32 %s3, 4
      %s49 = int_to_ptr.hbm [resolvable:$true] %s48
      %s50 = sshll.u32 [#allocation7], 4
      %s51 = int_to_ptr.vmem [resolvable:$true] %s50
      %56 = dma.hbm_to_vmem [thread:$0]  %s49, 1024, %s51, [#allocation6], 64, 64, 4
    $region17: #{tpu_custom_call.1} parent=1 // pred_fallthru
      _
    // Predicated region
    $region18: #{tpu_custom_call.1} parent=1 // pred_check
      _
    $region19: #{tpu_custom_call.1} parent=1 // pred_check_branch
      %58 = sbr.rel (0) target = $region21
    $region20: #{tpu_custom_call.1} parent=1 // pred_region
      _
    $region21: #{tpu_custom_call.1} parent=1 // pred_fallthru
      _
    // Predicated region
    $region22: #{tpu_custom_call.1} parent=1 // pred_check
      _
    $region23: #{tpu_custom_call.1} parent=1 // pred_check_branch
      %60 = sbr.rel (0) target = $region25
    $region24: #{tpu_custom_call.1} parent=1 // pred_region
      %62 = vsyncadd [#allocation9], 0
      %s63 = sshll.u32 %s5, 4
      %s64 = int_to_ptr.hbm [resolvable:$true] %s63
      %s65 = sshll.u32 [#allocation8], 4
      %s66 = int_to_ptr.vmem [resolvable:$true] %s65
      %71 = dma.hbm_to_vmem [thread:$0]  %s64, 1024, %s66, [#allocation9], 64, 64, 4
    $region25: #{tpu_custom_call.1} parent=1 // pred_fallthru
      _
    // Predicated region
    $region26: #{tpu_custom_call.1} parent=1 // pred_check
      _
    $region27: #{tpu_custom_call.1} parent=1 // pred_check_branch
      %73 = sbr.rel (0) target = $region29
    $region28: #{tpu_custom_call.1} parent=1 // pred_region
      _
    $region29: #{tpu_custom_call.1} parent=1 // pred_fallthru
      _
    // Predicated region
    $region30: #{tpu_custom_call.1} parent=1 // pred_check
      _
    $region31: #{tpu_custom_call.1} parent=1 // pred_check_branch
      %75 = sbr.rel (0) target = $region33
    $region32: #{tpu_custom_call.1} parent=1 // pred_region
      %77 = dma.done [#allocation3], 896
    $region33: #{tpu_custom_call.1} parent=1 // pred_fallthru
      _
    // Predicated region
    $region34: #{tpu_custom_call.1} parent=1 // pred_check
      _
    $region35: #{tpu_custom_call.1} parent=1 // pred_check_branch
      %79 = sbr.rel (0) target = $region37
    $region36: #{tpu_custom_call.1} parent=1 // pred_region
      %81 = dma.done [#allocation6], 7168
    $region37: #{tpu_custom_call.1} parent=1 // pred_fallthru
      _
    // Predicated region
    $region38: #{tpu_custom_call.1} parent=1 // pred_check
      _
    $region39: #{tpu_custom_call.1} parent=1 // pred_check_branch
      %83 = sbr.rel (0) target = $region41
    $region40: #{tpu_custom_call.1} parent=1 // pred_region
      %85 = dma.done [#allocation6], 1024
    $region41: #{tpu_custom_call.1} parent=1 // pred_fallthru
      _
    // Predicated region
    $region42: #{tpu_custom_call.1} parent=1 // pred_check
      _
    $region43: #{tpu_custom_call.1} parent=1 // pred_check_branch
      %87 = sbr.rel (0) target = $region45
    $region44: #{tpu_custom_call.1} parent=1 // pred_region
      %89 = dma.done [#allocation9], 1024
    $region45: #{tpu_custom_call.1} parent=1 // pred_fallthru
      _
    %v90 = vld [vmem:[#allocation2] sm:$0xff]
    %v91 = vld [vmem:[#allocation2 + $0x8] sm:$0xff]
    %v92 = vld [vmem:[#allocation2 + $0x10] sm:$0xff]
    %v93 = vld [vmem:[#allocation2 + $0x18] sm:$0xf]
    %v94 = vld [vmem:[#allocation2 + $0x1c] sm:$0xff]
    %v95 = vld [vmem:[#allocation2 + $0x24] sm:$0xff]
    %v96 = vld [vmem:[#allocation2 + $0x2c] sm:$0xff]
    %v97 = vld [vmem:[#allocation2 + $0x34] sm:$0xf]
    %v98 = vld [vmem:[#allocation5] sm:$0xf]
    %v99 = vld [vmem:[#allocation5 + $0x4] sm:$0xf]
    %v100 = vld [vmem:[#allocation5 + $0x8] sm:$0xf]
    %v101 = vld [vmem:[#allocation5 + $0xc] sm:$0xf]
    %v102 = vld [vmem:[#allocation5 + $0x10] sm:$0xf]
    %v103 = vld [vmem:[#allocation5 + $0x14] sm:$0xf]
    %v104 = vld [vmem:[#allocation5 + $0x18] sm:$0xf]
    %v105 = vld [vmem:[#allocation5 + $0x1c] sm:$0xf]
    %v106 = vld [vmem:[#allocation5 + $0x20] sm:$0xf]
    %v107 = vld [vmem:[#allocation5 + $0x24] sm:$0xf]
    %v108 = vld [vmem:[#allocation5 + $0x28] sm:$0xf]
    %v109 = vld [vmem:[#allocation5 + $0x2c] sm:$0xf]
    %v110 = vld [vmem:[#allocation5 + $0x30] sm:$0xf]
    %v111 = vld [vmem:[#allocation5 + $0x34] sm:$0xf]
    %v112 = vld [vmem:[#allocation5 + $0x38] sm:$0xf]
    %v113 = vld [vmem:[#allocation5 + $0x3c] sm:$0xf]
    %v114 = vld [vmem:[#allocation5 + $0x40] sm:$0xf]
    %v115 = vld [vmem:[#allocation5 + $0x44] sm:$0xf]
    %v116 = vld [vmem:[#allocation5 + $0x48] sm:$0xf]
    %v117 = vld [vmem:[#allocation5 + $0x4c] sm:$0xf]
    %v118 = vld [vmem:[#allocation5 + $0x50] sm:$0xf]
    %v119 = vld [vmem:[#allocation5 + $0x54] sm:$0xf]
    %v120 = vld [vmem:[#allocation5 + $0x58] sm:$0xf]
    %v121 = vld [vmem:[#allocation5 + $0x5c] sm:$0xf]
    %v122 = vld [vmem:[#allocation5 + $0x60] sm:$0xf]
    %v123 = vld [vmem:[#allocation5 + $0x64] sm:$0xf]
    %v124 = vld [vmem:[#allocation5 + $0x68] sm:$0xf]
    %v125 = vld [vmem:[#allocation5 + $0x6c] sm:$0xf]
    %v126 = vld [vmem:[#allocation5 + $0x70] sm:$0xf]
    %v127 = vld [vmem:[#allocation5 + $0x74] sm:$0xf]
    %v128 = vld [vmem:[#allocation5 + $0x78] sm:$0xf]
    %v129 = vld [vmem:[#allocation5 + $0x7c] sm:$0xf]
    %v130 = vld [vmem:[#allocation5 + $0x80] sm:$0xf]
    %v131 = vld [vmem:[#allocation5 + $0x84] sm:$0xf]
    %v132 = vld [vmem:[#allocation5 + $0x88] sm:$0xf]
    %v133 = vld [vmem:[#allocation5 + $0x8c] sm:$0xf]
    %v134 = vld [vmem:[#allocation5 + $0x90] sm:$0xf]
    %v135 = vld [vmem:[#allocation5 + $0x94] sm:$0xf]
    %v136 = vld [vmem:[#allocation5 + $0x98] sm:$0xf]
    %v137 = vld [vmem:[#allocation5 + $0x9c] sm:$0xf]
    %v138 = vld [vmem:[#allocation5 + $0xa0] sm:$0xf]
    %v139 = vld [vmem:[#allocation5 + $0xa4] sm:$0xf]
    %v140 = vld [vmem:[#allocation5 + $0xa8] sm:$0xf]
    %v141 = vld [vmem:[#allocation5 + $0xac] sm:$0xf]
    %v142 = vld [vmem:[#allocation5 + $0xb0] sm:$0xf]
    %v143 = vld [vmem:[#allocation5 + $0xb4] sm:$0xf]
    %v144 = vld [vmem:[#allocation5 + $0xb8] sm:$0xf]
    %v145 = vld [vmem:[#allocation5 + $0xbc] sm:$0xf]
    %v146 = vld [vmem:[#allocation5 + $0xc0] sm:$0xf]
    %v147 = vld [vmem:[#allocation5 + $0xc4] sm:$0xf]
    %v148 = vld [vmem:[#allocation5 + $0xc8] sm:$0xf]
    %v149 = vld [vmem:[#allocation5 + $0xcc] sm:$0xf]
    %v150 = vld [vmem:[#allocation5 + $0xd0] sm:$0xf]
    %v151 = vld [vmem:[#allocation5 + $0xd4] sm:$0xf]
    %v152 = vld [vmem:[#allocation5 + $0xd8] sm:$0xf]
    %v153 = vld [vmem:[#allocation5 + $0xdc] sm:$0xf]
    %v154 = vld [vmem:[#allocation5 + $0xe0] sm:$0xf]
    %v155 = vld [vmem:[#allocation5 + $0xe4] sm:$0xf]
    %v156 = vld [vmem:[#allocation5 + $0xe8] sm:$0xf]
    %v157 = vld [vmem:[#allocation5 + $0xec] sm:$0xf]
    %v158 = vld [vmem:[#allocation5 + $0xf0] sm:$0xf]
    %v159 = vld [vmem:[#allocation5 + $0xf4] sm:$0xf]
    %v160 = vld [vmem:[#allocation5 + $0xf8] sm:$0xf]
    %v161 = vld [vmem:[#allocation5 + $0xfc] sm:$0xf]
    %v162 = vld [vmem:[#allocation5 + $0x100] sm:$0xf]
    %v163 = vld [vmem:[#allocation5 + $0x104] sm:$0xf]
    %v164 = vld [vmem:[#allocation5 + $0x108] sm:$0xf]
    %v165 = vld [vmem:[#allocation5 + $0x10c] sm:$0xf]
    %v166 = vld [vmem:[#allocation5 + $0x110] sm:$0xf]
    %v167 = vld [vmem:[#allocation5 + $0x114] sm:$0xf]
    %v168 = vld [vmem:[#allocation5 + $0x118] sm:$0xf]
    %v169 = vld [vmem:[#allocation5 + $0x11c] sm:$0xf]
    %v170 = vld [vmem:[#allocation5 + $0x120] sm:$0xf]
    %v171 = vld [vmem:[#allocation5 + $0x124] sm:$0xf]
    %v172 = vld [vmem:[#allocation5 + $0x128] sm:$0xf]
    %v173 = vld [vmem:[#allocation5 + $0x12c] sm:$0xf]
    %v174 = vld [vmem:[#allocation5 + $0x130] sm:$0xf]
    %v175 = vld [vmem:[#allocation5 + $0x134] sm:$0xf]
    %v176 = vld [vmem:[#allocation5 + $0x138] sm:$0xf]
    %v177 = vld [vmem:[#allocation5 + $0x13c] sm:$0xf]
    %v178 = vld [vmem:[#allocation5 + $0x140] sm:$0xf]
    %v179 = vld [vmem:[#allocation5 + $0x144] sm:$0xf]
    %v180 = vld [vmem:[#allocation5 + $0x148] sm:$0xf]
    %v181 = vld [vmem:[#allocation5 + $0x14c] sm:$0xf]
    %v182 = vld [vmem:[#allocation5 + $0x150] sm:$0xf]
    %v183 = vld [vmem:[#allocation5 + $0x154] sm:$0xf]
    %v184 = vld [vmem:[#allocation5 + $0x158] sm:$0xf]
    %v185 = vld [vmem:[#allocation5 + $0x15c] sm:$0xf]
    %v186 = vld [vmem:[#allocation5 + $0x160] sm:$0xf]
    %v187 = vld [vmem:[#allocation5 + $0x164] sm:$0xf]
    %v188 = vld [vmem:[#allocation5 + $0x168] sm:$0xf]
    %v189 = vld [vmem:[#allocation5 + $0x16c] sm:$0xf]
    %v190 = vld [vmem:[#allocation5 + $0x170] sm:$0xf]
    %v191 = vld [vmem:[#allocation5 + $0x174] sm:$0xf]
    %v192 = vld [vmem:[#allocation5 + $0x178] sm:$0xf]
    %v193 = vld [vmem:[#allocation5 + $0x17c] sm:$0xf]
    %v194 = vld [vmem:[#allocation5 + $0x180] sm:$0xf]
    %v195 = vld [vmem:[#allocation5 + $0x184] sm:$0xf]
    %v196 = vld [vmem:[#allocation5 + $0x188] sm:$0xf]
    %v197 = vld [vmem:[#allocation5 + $0x18c] sm:$0xf]
    %v198 = vld [vmem:[#allocation5 + $0x190] sm:$0xf]
    %v199 = vld [vmem:[#allocation5 + $0x194] sm:$0xf]
    %v200 = vld [vmem:[#allocation5 + $0x198] sm:$0xf]
    %v201 = vld [vmem:[#allocation5 + $0x19c] sm:$0xf]
    %v202 = vld [vmem:[#allocation5 + $0x1a0] sm:$0xf]
    %v203 = vld [vmem:[#allocation5 + $0x1a4] sm:$0xf]
    %v204 = vld [vmem:[#allocation5 + $0x1a8] sm:$0xf]
    %v205 = vld [vmem:[#allocation5 + $0x1ac] sm:$0xf]
    %v206 = vld [vmem:[#allocation5 + $0x1b0] sm:$0xf]
    %v207 = vld [vmem:[#allocation5 + $0x1b4] sm:$0xf]
    %v208 = vld [vmem:[#allocation5 + $0x1b8] sm:$0xf]
    %v209 = vld [vmem:[#allocation5 + $0x1bc] sm:$0xf]
    %v210 = vld [vmem:[%s2] sm:$0x1]
    %v212 = vperm.slane %v210, 0
    %v222 = vunpack.c.l.b16 %v90
    %v223 = vunpack.c.h.b16 %v90
    %v224 = vunpack.c.l.b16 %v91
    %v225 = vunpack.c.h.b16 %v91
    %v226 = vunpack.c.l.b16 %v92
    %v227 = vunpack.c.h.b16 %v92
    %v228 = vunpack.c.l.b16 %v93
    %v229 = vunpack.c.l.b16 %v94
    %v230 = vunpack.c.h.b16 %v94
    %v231 = vunpack.c.l.b16 %v95
    %v232 = vunpack.c.h.b16 %v95
    %v233 = vunpack.c.l.b16 %v96
    %v234 = vunpack.c.h.b16 %v96
    %v235 = vunpack.c.l.b16 %v97
    %v236 = vpack.c.b16 %v229, %v222
    %v237 = vpack.c.b16 %v230, %v223
    %v238 = vpack.c.b16 %v231, %v224
    %v239 = vpack.c.b16 %v232, %v225
    %v240 = vpack.c.b16 %v233, %v226
    %v241 = vpack.c.b16 %v234, %v227
    %v242 = vpack.c.b16 %v235, %v228
    %v362 = vunpack.c.l.b16 %v98
    %v363 = vunpack.c.l.b16 %v99
    %v364 = vunpack.c.l.b16 %v100
    %v365 = vunpack.c.l.b16 %v101
    %v366 = vunpack.c.l.b16 %v102
    %v367 = vunpack.c.l.b16 %v103
    %v368 = vunpack.c.l.b16 %v104
    %v369 = vunpack.c.l.b16 %v105
    %v370 = vunpack.c.l.b16 %v106
    %v371 = vunpack.c.l.b16 %v107
    %v372 = vunpack.c.l.b16 %v108
    %v373 = vunpack.c.l.b16 %v109
    %v374 = vunpack.c.l.b16 %v110
    %v375 = vunpack.c.l.b16 %v111
    %v376 = vunpack.c.l.b16 %v112
    %v377 = vunpack.c.l.b16 %v113
    %v378 = vunpack.c.l.b16 %v114
    %v379 = vunpack.c.l.b16 %v115
    %v380 = vunpack.c.l.b16 %v116
    %v381 = vunpack.c.l.b16 %v117
    %v382 = vunpack.c.l.b16 %v118
    %v383 = vunpack.c.l.b16 %v119
    %v384 = vunpack.c.l.b16 %v120
    %v385 = vunpack.c.l.b16 %v121
    %v386 = vunpack.c.l.b16 %v122
    %v387 = vunpack.c.l.b16 %v123
    %v388 = vunpack.c.l.b16 %v124
    %v389 = vunpack.c.l.b16 %v125
    %v390 = vunpack.c.l.b16 %v126
    %v391 = vunpack.c.l.b16 %v127
    %v392 = vunpack.c.l.b16 %v128
    %v393 = vunpack.c.l.b16 %v129
    %v394 = vunpack.c.l.b16 %v130
    %v395 = vunpack.c.l.b16 %v131
    %v396 = vunpack.c.l.b16 %v132
    %v397 = vunpack.c.l.b16 %v133
    %v398 = vunpack.c.l.b16 %v134
    %v399 = vunpack.c.l.b16 %v135
    %v400 = vunpack.c.l.b16 %v136
    %v401 = vunpack.c.l.b16 %v137
    %v402 = vunpack.c.l.b16 %v138
    %v403 = vunpack.c.l.b16 %v139
    %v404 = vunpack.c.l.b16 %v140
    %v405 = vunpack.c.l.b16 %v141
    %v406 = vunpack.c.l.b16 %v142
    %v407 = vunpack.c.l.b16 %v143
    %v408 = vunpack.c.l.b16 %v144
    %v409 = vunpack.c.l.b16 %v145
    %v410 = vunpack.c.l.b16 %v146
    %v411 = vunpack.c.l.b16 %v147
    %v412 = vunpack.c.l.b16 %v148
    %v413 = vunpack.c.l.b16 %v149
    %v414 = vunpack.c.l.b16 %v150
    %v415 = vunpack.c.l.b16 %v151
    %v416 = vunpack.c.l.b16 %v152
    %v417 = vunpack.c.l.b16 %v153
    %v418 = vunpack.c.l.b16 %v154
    %v419 = vunpack.c.l.b16 %v155
    %v420 = vunpack.c.l.b16 %v156
    %v421 = vunpack.c.l.b16 %v157
    %v422 = vunpack.c.l.b16 %v158
    %v423 = vunpack.c.l.b16 %v159
    %v424 = vunpack.c.l.b16 %v160
    %v425 = vunpack.c.l.b16 %v161
    %v426 = vunpack.c.l.b16 %v162
    %v427 = vunpack.c.l.b16 %v163
    %v428 = vunpack.c.l.b16 %v164
    %v429 = vunpack.c.l.b16 %v165
    %v430 = vunpack.c.l.b16 %v166
    %v431 = vunpack.c.l.b16 %v167
    %v432 = vunpack.c.l.b16 %v168
    %v433 = vunpack.c.l.b16 %v169
    %v434 = vunpack.c.l.b16 %v170
    %v435 = vunpack.c.l.b16 %v171
    %v436 = vunpack.c.l.b16 %v172
    %v437 = vunpack.c.l.b16 %v173
    %v438 = vunpack.c.l.b16 %v174
    %v439 = vunpack.c.l.b16 %v175
    %v440 = vunpack.c.l.b16 %v176
    %v441 = vunpack.c.l.b16 %v177
    %v442 = vunpack.c.l.b16 %v178
    %v443 = vunpack.c.l.b16 %v179
    %v444 = vunpack.c.l.b16 %v180
    %v445 = vunpack.c.l.b16 %v181
    %v446 = vunpack.c.l.b16 %v182
    %v447 = vunpack.c.l.b16 %v183
    %v448 = vunpack.c.l.b16 %v184
    %v449 = vunpack.c.l.b16 %v185
    %v450 = vunpack.c.l.b16 %v186
    %v451 = vunpack.c.l.b16 %v187
    %v452 = vunpack.c.l.b16 %v188
    %v453 = vunpack.c.l.b16 %v189
    %v454 = vunpack.c.l.b16 %v190
    %v455 = vunpack.c.l.b16 %v191
    %v456 = vunpack.c.l.b16 %v192
    %v457 = vunpack.c.l.b16 %v193
    %v458 = vunpack.c.l.b16 %v194
    %v459 = vunpack.c.l.b16 %v195
    %v460 = vunpack.c.l.b16 %v196
    %v461 = vunpack.c.l.b16 %v197
    %v462 = vunpack.c.l.b16 %v198
    %v463 = vunpack.c.l.b16 %v199
    %v464 = vunpack.c.l.b16 %v200
    %v465 = vunpack.c.l.b16 %v201
    %v466 = vunpack.c.l.b16 %v202
    %v467 = vunpack.c.l.b16 %v203
    %v468 = vunpack.c.l.b16 %v204
    %v469 = vunpack.c.l.b16 %v205
    %v470 = vunpack.c.l.b16 %v206
    %v471 = vunpack.c.l.b16 %v207
    %v472 = vunpack.c.l.b16 %v208
    %v473 = vunpack.c.l.b16 %v209
    %v474 = vpack.c.b16 %v363, %v362
    %v475 = vpack.c.b16 %v365, %v364
    %v476 = vpack.c.b16 %v367, %v366
    %v477 = vpack.c.b16 %v369, %v368
    %v478 = vpack.c.b16 %v371, %v370
    %v479 = vpack.c.b16 %v373, %v372
    %v480 = vpack.c.b16 %v375, %v374
    %v481 = vpack.c.b16 %v377, %v376
    %v482 = vpack.c.b16 %v379, %v378
    %v483 = vpack.c.b16 %v381, %v380
    %v484 = vpack.c.b16 %v383, %v382
    %v485 = vpack.c.b16 %v385, %v384
    %v486 = vpack.c.b16 %v387, %v386
    %v487 = vpack.c.b16 %v389, %v388
    %v488 = vpack.c.b16 %v391, %v390
    %v489 = vpack.c.b16 %v393, %v392
    %v490 = vpack.c.b16 %v395, %v394
    %v491 = vpack.c.b16 %v397, %v396
    %v492 = vpack.c.b16 %v399, %v398
    %v493 = vpack.c.b16 %v401, %v400
    %v494 = vpack.c.b16 %v403, %v402
    %v495 = vpack.c.b16 %v405, %v404
    %v496 = vpack.c.b16 %v407, %v406
    %v497 = vpack.c.b16 %v409, %v408
    %v498 = vpack.c.b16 %v411, %v410
    %v499 = vpack.c.b16 %v413, %v412
    %v500 = vpack.c.b16 %v415, %v414
    %v501 = vpack.c.b16 %v417, %v416
    %v502 = vpack.c.b16 %v419, %v418
    %v503 = vpack.c.b16 %v421, %v420
    %v504 = vpack.c.b16 %v423, %v422
    %v505 = vpack.c.b16 %v425, %v424
    %v506 = vpack.c.b16 %v427, %v426
    %v507 = vpack.c.b16 %v429, %v428
    %v508 = vpack.c.b16 %v431, %v430
    %v509 = vpack.c.b16 %v433, %v432
    %v510 = vpack.c.b16 %v435, %v434
    %v511 = vpack.c.b16 %v437, %v436
    %v512 = vpack.c.b16 %v439, %v438
    %v513 = vpack.c.b16 %v441, %v440
    %v514 = vpack.c.b16 %v443, %v442
    %v515 = vpack.c.b16 %v445, %v444
    %v516 = vpack.c.b16 %v447, %v446
    %v517 = vpack.c.b16 %v449, %v448
    %v518 = vpack.c.b16 %v451, %v450
    %v519 = vpack.c.b16 %v453, %v452
    %v520 = vpack.c.b16 %v455, %v454
    %v521 = vpack.c.b16 %v457, %v456
    %v522 = vpack.c.b16 %v459, %v458
    %v523 = vpack.c.b16 %v461, %v460
    %v524 = vpack.c.b16 %v463, %v462
    %v525 = vpack.c.b16 %v465, %v464
    %v526 = vpack.c.b16 %v467, %v466
    %v527 = vpack.c.b16 %v469, %v468
    %v528 = vpack.c.b16 %v471, %v470
    %v529 = vpack.c.b16 %v473, %v472
    %586 = vmatpush.bf16.msra.mxu0 %v481
    %587 = vmatpush.bf16.msra.mxu0 %v480
    %588 = vmatpush.bf16.msra.mxu0 %v479
    %589 = vmatpush.bf16.msra.mxu0 %v478
    %590 = vmatpush.bf16.msra.mxu0 %v477
    %591 = vmatpush.bf16.msra.mxu0 %v476
    %592 = vmatpush.bf16.msra.mxu0 %v475
    %593 = vmatpush.bf16.msra.mxu0 %v474
    %594 = vmatmul.bf16.gmra.mxu0 %v236
    %v595 = vpop.f32.mrf.mxu0
    %v596 = vadd.f32 %v212, %v595
    %v597 = vpop.f32.mrf.mxu0
    %v598 = vadd.f32 %v212, %v597
    %599 = vdwg.mxu0
    %600 = vmatpush.bf16.msra.mxu0 %v489
    %601 = vmatpush.bf16.msra.mxu0 %v488
    %602 = vmatpush.bf16.msra.mxu0 %v487
    %603 = vmatpush.bf16.msra.mxu0 %v486
    %604 = vmatpush.bf16.msra.mxu0 %v485
    %605 = vmatpush.bf16.msra.mxu0 %v484
    %606 = vmatpush.bf16.msra.mxu0 %v483
    %607 = vmatpush.bf16.msra.mxu0 %v482
    %608 = vmatmul.bf16.gmra.mxu0 %v237
    %v609 = vpop.f32.mrf.mxu0
    %v610 = vadd.f32 %v596, %v609
    %v611 = vpop.f32.mrf.mxu0
    %v612 = vadd.f32 %v598, %v611
    %613 = vdwg.mxu0
    %614 = vmatpush.bf16.msra.mxu0 %v497
    %615 = vmatpush.bf16.msra.mxu0 %v496
    %616 = vmatpush.bf16.msra.mxu0 %v495
    %617 = vmatpush.bf16.msra.mxu0 %v494
    %618 = vmatpush.bf16.msra.mxu0 %v493
    %619 = vmatpush.bf16.msra.mxu0 %v492
    %620 = vmatpush.bf16.msra.mxu0 %v491
    %621 = vmatpush.bf16.msra.mxu0 %v490
    %622 = vmatmul.bf16.gmra.mxu0 %v238
    %v623 = vpop.f32.mrf.mxu0
    %v624 = vadd.f32 %v610, %v623
    %v625 = vpop.f32.mrf.mxu0
    %v626 = vadd.f32 %v612, %v625
    %627 = vdwg.mxu0
    %628 = vmatpush.bf16.msra.mxu0 %v505
    %629 = vmatpush.bf16.msra.mxu0 %v504
    %630 = vmatpush.bf16.msra.mxu0 %v503
    %631 = vmatpush.bf16.msra.mxu0 %v502
    %632 = vmatpush.bf16.msra.mxu0 %v501
    %633 = vmatpush.bf16.msra.mxu0 %v500
    %634 = vmatpush.bf16.msra.mxu0 %v499
    %635 = vmatpush.bf16.msra.mxu0 %v498
    %636 = vmatmul.bf16.gmra.mxu0 %v239
    %v637 = vpop.f32.mrf.mxu0
    %v638 = vadd.f32 %v624, %v637
    %v639 = vpop.f32.mrf.mxu0
    %v640 = vadd.f32 %v626, %v639
    %641 = vdwg.mxu0
    %642 = vmatpush.bf16.msra.mxu0 %v513
    %643 = vmatpush.bf16.msra.mxu0 %v512
    %644 = vmatpush.bf16.msra.mxu0 %v511
    %645 = vmatpush.bf16.msra.mxu0 %v510
    %646 = vmatpush.bf16.msra.mxu0 %v509
    %647 = vmatpush.bf16.msra.mxu0 %v508
    %648 = vmatpush.bf16.msra.mxu0 %v507
    %649 = vmatpush.bf16.msra.mxu0 %v506
    %650 = vmatmul.bf16.gmra.mxu0 %v240
    %v651 = vpop.f32.mrf.mxu0
    %v652 = vadd.f32 %v638, %v651
    %v653 = vpop.f32.mrf.mxu0
    %v654 = vadd.f32 %v640, %v653
    %655 = vdwg.mxu0
    %656 = vmatpush.bf16.msra.mxu0 %v521
    %657 = vmatpush.bf16.msra.mxu0 %v520
    %658 = vmatpush.bf16.msra.mxu0 %v519
    %659 = vmatpush.bf16.msra.mxu0 %v518
    %660 = vmatpush.bf16.msra.mxu0 %v517
    %661 = vmatpush.bf16.msra.mxu0 %v516
    %662 = vmatpush.bf16.msra.mxu0 %v515
    %663 = vmatpush.bf16.msra.mxu0 %v514
    %664 = vmatmul.bf16.gmra.mxu0 %v241
    %v665 = vpop.f32.mrf.mxu0
    %v666 = vadd.f32 %v652, %v665
    %v667 = vpop.f32.mrf.mxu0
    %v668 = vadd.f32 %v654, %v667
    %669 = vdwg.mxu0
    %670 = vmatpush.bf16.msra.mxu0 %v529
    %671 = vmatpush.bf16.msra.mxu0 %v528
    %672 = vmatpush.bf16.msra.mxu0 %v527
    %673 = vmatpush.bf16.msra.mxu0 %v526
    %674 = vmatpush.bf16.msra.mxu0 %v525
    %675 = vmatpush.bf16.msra.mxu0 %v524
    %676 = vmatpush.bf16.msra.mxu0 %v523
    %677 = vmatpush.bf16.msra.mxu0 %v522
    %678 = vmatmul.bf16.gmra.mxu0 %v242
    %v679 = vpop.f32.mrf.mxu0
    %v680 = vadd.f32 %v666, %v679
    %v681 = vpop.f32.mrf.mxu0
    %v682 = vadd.f32 %v668, %v681
    %683 = vdwg.mxu0
    %v684 = vmax.f32 %v680, 0.0
    %v685 = vmax.f32 %v682, 0.0
    %v686 = vpack.c.bf16 %v685, %v684
    %v687 = vld [vmem:[#allocation7] sm:$0xf]
    %v688 = vld [vmem:[#allocation7 + $0x4] sm:$0xf]
    %v689 = vld [vmem:[#allocation7 + $0x8] sm:$0xf]
    %v690 = vld [vmem:[#allocation7 + $0xc] sm:$0xf]
    %v691 = vld [vmem:[#allocation7 + $0x10] sm:$0xf]
    %v692 = vld [vmem:[#allocation7 + $0x14] sm:$0xf]
    %v693 = vld [vmem:[#allocation7 + $0x18] sm:$0xf]
    %v694 = vld [vmem:[#allocation7 + $0x1c] sm:$0xf]
    %v695 = vld [vmem:[#allocation7 + $0x20] sm:$0xf]
    %v696 = vld [vmem:[#allocation7 + $0x24] sm:$0xf]
    %v697 = vld [vmem:[#allocation7 + $0x28] sm:$0xf]
    %v698 = vld [vmem:[#allocation7 + $0x2c] sm:$0xf]
    %v699 = vld [vmem:[#allocation7 + $0x30] sm:$0xf]
    %v700 = vld [vmem:[#allocation7 + $0x34] sm:$0xf]
    %v701 = vld [vmem:[#allocation7 + $0x38] sm:$0xf]
    %v702 = vld [vmem:[#allocation7 + $0x3c] sm:$0xf]
    %v703 = vld [vmem:[%s4] sm:$0x1]
    %v705 = vperm.slane %v703, 0
    %v723 = vunpack.c.l.b16 %v687
    %v724 = vunpack.c.l.b16 %v688
    %v725 = vunpack.c.l.b16 %v689
    %v726 = vunpack.c.l.b16 %v690
    %v727 = vunpack.c.l.b16 %v691
    %v728 = vunpack.c.l.b16 %v692
    %v729 = vunpack.c.l.b16 %v693
    %v730 = vunpack.c.l.b16 %v694
    %v731 = vunpack.c.l.b16 %v695
    %v732 = vunpack.c.l.b16 %v696
    %v733 = vunpack.c.l.b16 %v697
    %v734 = vunpack.c.l.b16 %v698
    %v735 = vunpack.c.l.b16 %v699
    %v736 = vunpack.c.l.b16 %v700
    %v737 = vunpack.c.l.b16 %v701
    %v738 = vunpack.c.l.b16 %v702
    %v739 = vpack.c.b16 %v724, %v723
    %v740 = vpack.c.b16 %v726, %v725
    %v741 = vpack.c.b16 %v728, %v727
    %v742 = vpack.c.b16 %v730, %v729
    %v743 = vpack.c.b16 %v732, %v731
    %v744 = vpack.c.b16 %v734, %v733
    %v745 = vpack.c.b16 %v736, %v735
    %v746 = vpack.c.b16 %v738, %v737
    %755 = vmatpush.bf16.msra.mxu0 %v746
    %756 = vmatpush.bf16.msra.mxu0 %v745
    %757 = vmatpush.bf16.msra.mxu0 %v744
    %758 = vmatpush.bf16.msra.mxu0 %v743
    %759 = vmatpush.bf16.msra.mxu0 %v742
    %760 = vmatpush.bf16.msra.mxu0 %v741
    %761 = vmatpush.bf16.msra.mxu0 %v740
    %762 = vmatpush.bf16.msra.mxu0 %v739
    %763 = vmatmul.bf16.gmra.mxu0 %v686
    %v764 = vpop.f32.mrf.mxu0
    %v765 = vadd.f32 %v705, %v764
    %v766 = vpop.f32.mrf.mxu0
    %v767 = vadd.f32 %v705, %v766
    %768 = vdwg.mxu0
    %v769 = vxor.u32 %v765, 2147483648
    %v770 = vxor.u32 %v767, 2147483648
    %v771 = vmul.f32 %v769, 1.442695
    %v772 = vpow.pop %v771
    %v773 = vmul.f32 %v770, 1.442695
    %v774 = vpow.pop %v773
    %v775 = vadd.f32 %v772, 1.0
    %v776 = vadd.f32 %v774, 1.0
    %v777 = vrcp.pop %v775
    %v778 = vmul.f32 %v775, %v777
    %v779 = vsub.f32 1.0, %v778
    %v780 = vmul.f32 %v777, %v779
    %v781 = vadd.f32 %v777, %v780
    %vm782 = vweird.f32 %v775
    %vm783 = vweird.f32 %v777
    %vm784 = vmor %vm782, %vm783
    %v785 = vsel %vm784, %v777, %v781
    %v786 = vand.u32 2147483647, %v775
    %vm787 = vcmp.eq.f32.partialorder %v786, 8.507059e+37
    %v788 = vand.u32 %v775, 2147483648
    %v789 = vor.u32 1.1754944e-38, %v788
    %v790 = vsel %vm787, %v789, %v785
    %v791 = vmul.f32 1.0, %v790
    %v792 = vrcp.pop %v776
    %v793 = vmul.f32 %v776, %v792
    %v794 = vsub.f32 1.0, %v793
    %v795 = vmul.f32 %v792, %v794
    %v796 = vadd.f32 %v792, %v795
    %vm797 = vweird.f32 %v776
    %vm798 = vweird.f32 %v792
    %vm799 = vmor %vm797, %vm798
    %v800 = vsel %vm799, %v792, %v796
    %v801 = vand.u32 2147483647, %v776
    %vm802 = vcmp.eq.f32.partialorder %v801, 8.507059e+37
    %v803 = vand.u32 %v776, 2147483648
    %v804 = vor.u32 1.1754944e-38, %v803
    %v805 = vsel %vm802, %v804, %v800
    %v806 = vmul.f32 1.0, %v805
    %v807 = vpack.c.bf16 %v806, %v791
    %v808 = vld [vmem:[#allocation8] sm:$0xf]
    %v809 = vld [vmem:[#allocation8 + $0x4] sm:$0xf]
    %v810 = vld [vmem:[#allocation8 + $0x8] sm:$0xf]
    %v811 = vld [vmem:[#allocation8 + $0xc] sm:$0xf]
    %v812 = vld [vmem:[#allocation8 + $0x10] sm:$0xf]
    %v813 = vld [vmem:[#allocation8 + $0x14] sm:$0xf]
    %v814 = vld [vmem:[#allocation8 + $0x18] sm:$0xf]
    %v815 = vld [vmem:[#allocation8 + $0x1c] sm:$0xf]
    %v816 = vld [vmem:[#allocation8 + $0x20] sm:$0xf]
    %v817 = vld [vmem:[#allocation8 + $0x24] sm:$0xf]
    %v818 = vld [vmem:[#allocation8 + $0x28] sm:$0xf]
    %v819 = vld [vmem:[#allocation8 + $0x2c] sm:$0xf]
    %v820 = vld [vmem:[#allocation8 + $0x30] sm:$0xf]
    %v821 = vld [vmem:[#allocation8 + $0x34] sm:$0xf]
    %v822 = vld [vmem:[#allocation8 + $0x38] sm:$0xf]
    %v823 = vld [vmem:[#allocation8 + $0x3c] sm:$0xf]
    %v824 = vld [vmem:[%s6] sm:$0x1]
    %v826 = vperm.slane %v824, 0
    %v844 = vunpack.c.l.b16 %v808
    %v845 = vunpack.c.l.b16 %v809
    %v846 = vunpack.c.l.b16 %v810
    %v847 = vunpack.c.l.b16 %v811
    %v848 = vunpack.c.l.b16 %v812
    %v849 = vunpack.c.l.b16 %v813
    %v850 = vunpack.c.l.b16 %v814
    %v851 = vunpack.c.l.b16 %v815
    %v852 = vunpack.c.l.b16 %v816
    %v853 = vunpack.c.l.b16 %v817
    %v854 = vunpack.c.l.b16 %v818
    %v855 = vunpack.c.l.b16 %v819
    %v856 = vunpack.c.l.b16 %v820
    %v857 = vunpack.c.l.b16 %v821
    %v858 = vunpack.c.l.b16 %v822
    %v859 = vunpack.c.l.b16 %v823
    %v860 = vpack.c.b16 %v845, %v844
    %v861 = vpack.c.b16 %v847, %v846
    %v862 = vpack.c.b16 %v849, %v848
    %v863 = vpack.c.b16 %v851, %v850
    %v864 = vpack.c.b16 %v853, %v852
    %v865 = vpack.c.b16 %v855, %v854
    %v866 = vpack.c.b16 %v857, %v856
    %v867 = vpack.c.b16 %v859, %v858
    %876 = vmatpush.bf16.msra.mxu0 %v867
    %877 = vmatpush.bf16.msra.mxu0 %v866
    %878 = vmatpush.bf16.msra.mxu0 %v865
    %879 = vmatpush.bf16.msra.mxu0 %v864
    %880 = vmatpush.bf16.msra.mxu0 %v863
    %881 = vmatpush.bf16.msra.mxu0 %v862
    %882 = vmatpush.bf16.msra.mxu0 %v861
    %883 = vmatpush.bf16.msra.mxu0 %v860
    %884 = vmatmul.bf16.gmra.mxu0 %v807
    %v885 = vpop.f32.mrf.mxu0
    %v886 = vadd.f32 %v826, %v885
    %v887 = vpop.f32.mrf.mxu0
    %v888 = vadd.f32 %v826, %v887
    %889 = vdwg.mxu0
    %890 = vst [vmem:[#allocation10] sm:$0xff] %v886
    %891 = vst [vmem:[#allocation10 + $0x8] sm:$0xff] %v888
    // Predicated region
    $region46: #{tpu_custom_call.1} parent=1 // pred_check
      _
    $region47: #{tpu_custom_call.1} parent=1 // pred_check_branch
      %893 = sbr.rel (0) target = $region49
    $region48: #{tpu_custom_call.1} parent=1 // pred_region
      %895 = vsyncadd [#allocation4], 0
      %s896 = sshll.u32 [#allocation10], 4
      %s897 = int_to_ptr.vmem [resolvable:$true] %s896
      %s898 = sshll.u32 %s7, 4
      %s899 = int_to_ptr.hbm [resolvable:$true] %s898
      %904 = dma.vmem_to_hbm [thread:$0]  %s897, 256, %s899, [#allocation4], 128, 128, 8
    $region49: #{tpu_custom_call.1} parent=1 // pred_fallthru
      _
    // Predicated region
    $region50: #{tpu_custom_call.1} parent=1 // pred_check
      _
    $region51: #{tpu_custom_call.1} parent=1 // pred_check_branch
      %906 = sbr.rel (0) target = $region53
    $region52: #{tpu_custom_call.1} parent=1 // pred_region
      %908 = dma.done [#allocation4], 256
    $region53: #{tpu_custom_call.1} parent=1 // pred_fallthru
      _
    %909 = vsyncpa [#allocation3], 1
    %910 = vsyncpa [#allocation6], 1
    %911 = vsyncpa [#allocation9], 1
    %912 = vsyncpa [#allocation4], 1

</llo_original>
